<compile_context>
chip_gen: v7x
topology: tpu7x:2x2x1
jax: 0.10.0
libtpu: 0.0.40
codegen_flags: <defaults>
</compile_context>

<pallas_src>
import functools

import jax
import jax.numpy as jnp
from jax.experimental import pallas as pl
from jax.experimental.pallas import tpu as pltpu


def _round_up(n: int, m: int) -> int:
    return ((n + m - 1) // m) * m


def _mix32(x):
    # lowbias32-style integer finalizer (uint32 in, uint32 out).
    x = x ^ (x >> 16)
    x = x * jnp.uint32(0x7FEB352D)
    x = x ^ (x >> 15)
    x = x * jnp.uint32(0x846CA68B)
    x = x ^ (x >> 16)
    return x


def prenet_kernel(seed_ref, x_ref, w1_ref, b1_ref, w2_ref, b2_ref, o_ref,
                  *, dropout_p: float, train: bool):
    tm, hp = o_ref.shape
    keep = 1.0 - float(dropout_p)
    apply_dropout = bool(train) and float(dropout_p) > 0.0

    if apply_dropout:
        # P(bits < thr) == keep up to a <=2^-32 bias (negligible).
        thr = jnp.uint32(min(int(keep * 4294967296.0), 4294967295))
        inv_keep = jnp.float32(1.0 / keep) if keep > 0.0 else jnp.float32(0.0)
        seed_u = seed_ref[0].astype(jnp.uint32)

        # Absolute element coordinates -> mask independent of tiling/execution order.
        rows = (jax.lax.broadcasted_iota(jnp.int32, (tm, hp), 0)
                + pl.program_id(0) * tm).astype(jnp.uint32)
        cols = jax.lax.broadcasted_iota(jnp.int32, (tm, hp), 1).astype(jnp.uint32)

        def dropout(h, layer_tag):
            k = (rows * jnp.uint32(0x9E3779B1)
                 ^ cols * jnp.uint32(0x85EBCA77)
                 ^ (seed_u + jnp.uint32(layer_tag) * jnp.uint32(0xC2B2AE3D)))
            bits = _mix32(k)
            return jnp.where(bits < thr, h * inv_keep, jnp.zeros_like(h))
    else:
        def dropout(h, layer_tag):
            return h

    # Layer 1: Linear + ReLU + Dropout (bf16 operands, f32 accumulation)
    h = jnp.dot(x_ref[...].astype(w1_ref.dtype), w1_ref[...],
                preferred_element_type=jnp.float32)
    h = jnp.maximum(h + b1_ref[...], 0.0)
    h = dropout(h, 1)

    # Layer 2: Linear + ReLU + Dropout
    h = jnp.dot(h.astype(w2_ref.dtype), w2_ref[...],
                preferred_element_type=jnp.float32)
    h = jnp.maximum(h + b2_ref[...], 0.0)
    h = dropout(h, 2)

    o_ref[...] = h.astype(o_ref.dtype)


def prenet(x, w1, b1, w2, b2, *, dropout_p=0.5, train=True, seed=0,
           tm=256, compute_dtype=jnp.bfloat16):
    """x: (B, T, Din); w: (in, out) i.e. y = x @ W + b (PyTorch W stored transposed)."""
    B, T, Din = x.shape
    H = w1.shape[1]
    M = B * T

    LANE, SUB = 128, 8
    din_p = _round_up(Din, LANE)
    h_p = _round_up(H, LANE)

    # Row tile: big (feeds the MXU, amortizes pipeline steps) but never larger than needed.
    tm_eff = _round_up(min(int(tm), _round_up(M, SUB)), SUB)
    m_p = _round_up(M, tm_eff)

    # Zero-pad to lane-dense shapes (padding is mathematically inert: zero rows/cols).
    x2 = jnp.pad(x.reshape(M, Din), ((0, m_p - M), (0, din_p - Din)))
    w1p = jnp.pad(w1, ((0, din_p - Din), (0, h_p - H))).astype(compute_dtype)
    w2p = jnp.pad(w2, ((0, h_p - H), (0, h_p - H))).astype(compute_dtype)
    b1p = jnp.pad(b1, (0, h_p - H)).reshape(1, h_p).astype(jnp.float32)
    b2p = jnp.pad(b2, (0, h_p - H)).reshape(1, h_p).astype(jnp.float32)
    seed_arr = jnp.array([seed], dtype=jnp.int32)

    kernel = functools.partial(prenet_kernel,
                               dropout_p=float(dropout_p), train=bool(train))

    out = pl.pallas_call(
        kernel,
        out_shape=jax.ShapeDtypeStruct((m_p, h_p), x.dtype),
        grid_spec=pltpu.PrefetchScalarGridSpec(
            num_scalar_prefetch=1,
            grid=(m_p // tm_eff,),
            in_specs=[
                pl.BlockSpec((tm_eff, din_p), lambda i, s: (i, 0)),  # x rows (streamed)
                pl.BlockSpec((din_p, h_p),    lambda i, s: (0, 0)),  # W1 (resident)
                pl.BlockSpec((1, h_p),        lambda i, s: (0, 0)),  # b1
                pl.BlockSpec((h_p, h_p),      lambda i, s: (0, 0)),  # W2 (resident)
                pl.BlockSpec((1, h_p),        lambda i, s: (0, 0)),  # b2
            ],
            out_specs=pl.BlockSpec((tm_eff, h_p), lambda i, s: (i, 0)),
        ),
        compiler_params=pltpu.CompilerParams(
            # Stateless (counter-hash) dropout -> row tiles are order-independent,
            # so they can be sharded across v7x's two TensorCores.
            dimension_semantics=("parallel",),
        ),
    )(seed_arr, x2, w1p, b1p, w2p, b2p)

    return out[:M, :H].reshape(B, T, H)


if __name__ == "__main__":
    # Small shapes consistent with PreNet(input_dim, output_dim, dropout_p)
    B, T = 2, 8
    input_dim, output_dim, dropout_p = 32, 32, 0.5

    key = jax.random.PRNGKey(0)
    kx, k1, k2 = jax.random.split(key, 3)

    def xavier(k, shape):
        fan_in, fan_out = shape
        lim = (6.0 / (fan_in + fan_out)) ** 0.5
        return jax.random.uniform(k, shape, jnp.float32, -lim, lim)

    x = jax.random.normal(kx, (B, T, input_dim), jnp.float32)
    w1 = xavier(k1, (input_dim, output_dim))
    b1 = jnp.zeros((output_dim,), jnp.float32)
    w2 = xavier(k2, (output_dim, output_dim))
    b2 = jnp.zeros((output_dim,), jnp.float32)

    # Training-mode run (dropout active, deterministic stateless mask).
    # NOTE: Tacotron2 conventionally keeps PreNet dropout active at inference too;
    # pass train=True there if that behavior is wanted. The mask stream is not
    # bit-identical to torch.nn.Dropout's RNG (impossible to reproduce exactly).
    y_train = prenet(x, w1, b1, w2, b2, dropout_p=dropout_p, train=True, seed=1234)
    jax.block_until_ready(y_train)

    # Eval-mode run (dropout is identity) — check against a pure-JAX reference that
    # applies the same bf16 operand rounding the kernel uses.
    y_eval = prenet(x, w1, b1, w2, b2, dropout_p=dropout_p, train=False)
    jax.block_until_ready(y_eval)

    f32 = jnp.float32
    xb = x.astype(jnp.bfloat16).astype(f32).reshape(-1, input_dim)
    w1b = w1.astype(jnp.bfloat16).astype(f32)
    w2b = w2.astype(jnp.bfloat16).astype(f32)
    h_ref = jnp.maximum(xb @ w1b + b1, 0.0)
    h_ref = h_ref.astype(jnp.bfloat16).astype(f32)
    y_ref = jnp.maximum(h_ref @ w2b + b2, 0.0).reshape(B, T, output_dim)

    assert y_train.shape == (B, T, output_dim)
    assert bool(jnp.all(jnp.isfinite(y_train)))
    assert jnp.allclose(y_eval, y_ref, atol=1e-3, rtol=1e-3), "eval-mode mismatch vs reference"

    print("KERNEL_OK")
</pallas_src>

<mosaic_0001>
module attributes {stable_mosaic.version = 11 : i64} {
  func.func @prenet_kernel(%arg0: i32, %arg1: memref<1xi32, #tpu.memory_space<smem>>, %arg2: memref<16x128xf32, #tpu.memory_space<vmem>>, %arg3: memref<128x128xbf16, #tpu.memory_space<vmem>>, %arg4: memref<1x128xf32, #tpu.memory_space<vmem>>, %arg5: memref<128x128xbf16, #tpu.memory_space<vmem>>, %arg6: memref<1x128xf32, #tpu.memory_space<vmem>>, %arg7: memref<16x128xf32, #tpu.memory_space<vmem>>) attributes {dimension_semantics = [#tpu.dimension_semantics<parallel>], iteration_bounds = array<i64: 1>, scalar_prefetch = 1 : i64, scratch_operands = 0 : i64, tpu.core_type = #tpu.core_type<tc>, window_params = [{transform_indices = @transform_0, window_bounds = array<i64: 16, 128>}, {pipeline_mode = #tpu.pipeline_mode<synchronous>, transform_indices = @transform_1, window_bounds = array<i64: 128, 128>}, {pipeline_mode = #tpu.pipeline_mode<synchronous>, transform_indices = @transform_2, window_bounds = array<i64: 1, 128>}, {pipeline_mode = #tpu.pipeline_mode<synchronous>, transform_indices = @transform_3, window_bounds = array<i64: 128, 128>}, {pipeline_mode = #tpu.pipeline_mode<synchronous>, transform_indices = @transform_4, window_bounds = array<i64: 1, 128>}, {transform_indices = @transform_5, window_bounds = array<i64: 16, 128>}]} {
    %c0 = arith.constant 0 : index
    %0 = memref.load %arg1[%c0] : memref<1xi32, #tpu.memory_space<smem>>
    %1 = tpu.iota {dimensions = array<i32: 0>} : vector<16x128xi32>
    %c16_i32 = arith.constant 16 : i32
    %2 = arith.muli %arg0, %c16_i32 : i32
    %3 = vector.broadcast %2 : i32 to vector<16x128xi32>
    %4 = arith.addi %1, %3 : vector<16x128xi32>
    %5 = tpu.iota {dimensions = array<i32: 1>} : vector<16x128xi32>
    %c0_0 = arith.constant 0 : index
    %c0_1 = arith.constant 0 : index
    %6 = vector.load %arg2[%c0_0, %c0_1] : memref<16x128xf32, #tpu.memory_space<vmem>>, vector<16x128xf32>
    %7 = arith.truncf %6 : vector<16x128xf32> to vector<16x128xbf16>
    %c0_2 = arith.constant 0 : index
    %c0_3 = arith.constant 0 : index
    %8 = vector.load %arg3[%c0_2, %c0_3] : memref<128x128xbf16, #tpu.memory_space<vmem>>, vector<128x128xbf16>
    %cst = arith.constant dense<0.000000e+00> : vector<16x128xf32>
    %9 = tpu.matmul %7, %8, %cst {dimension_numbers = #tpu.dot_dimension_numbers<[1], [0], [0], [1], [0, 0, 1, 1], [], []>} : vector<16x128xbf16>, vector<128x128xbf16>, vector<16x128xf32> -> vector<16x128xf32>
    %c0_4 = arith.constant 0 : index
    %c0_5 = arith.constant 0 : index
    %10 = vector.load %arg4[%c0_4, %c0_5] : memref<1x128xf32, #tpu.memory_space<vmem>>, vector<1x128xf32>
    %11 = vector.broadcast %10 : vector<1x128xf32> to vector<16x128xf32>
    %12 = arith.addf %9, %11 : vector<16x128xf32>
    %cst_6 = arith.constant 0.000000e+00 : f32
    %13 = vector.broadcast %cst_6 : f32 to vector<16x128xf32>
    %14 = arith.maximumf %12, %13 : vector<16x128xf32>
    %c-1640531535_i32 = arith.constant -1640531535 : i32
    %15 = vector.broadcast %c-1640531535_i32 : i32 to vector<16x128xi32>
    %16 = arith.muli %4, %15 : vector<16x128xi32>
    %c-2048144777_i32 = arith.constant -2048144777 : i32
    %17 = vector.broadcast %c-2048144777_i32 : i32 to vector<16x128xi32>
    %18 = arith.muli %5, %17 : vector<16x128xi32>
    %19 = arith.xori %16, %18 : vector<16x128xi32>
    %c1_i32 = arith.constant 1 : i32
    %c-1028477379_i32 = arith.constant -1028477379 : i32
    %20 = arith.muli %c1_i32, %c-1028477379_i32 : i32
    %21 = arith.addi %0, %20 : i32
    %22 = vector.broadcast %21 : i32 to vector<16x128xi32>
    %23 = arith.xori %19, %22 : vector<16x128xi32>
    %c16_i32_7 = arith.constant 16 : i32
    %24 = vector.broadcast %c16_i32_7 : i32 to vector<16x128xi32>
    %25 = arith.shrui %23, %24 : vector<16x128xi32>
    %26 = arith.xori %23, %25 : vector<16x128xi32>
    %c2146121005_i32 = arith.constant 2146121005 : i32
    %27 = vector.broadcast %c2146121005_i32 : i32 to vector<16x128xi32>
    %28 = arith.muli %26, %27 : vector<16x128xi32>
    %c15_i32 = arith.constant 15 : i32
    %29 = vector.broadcast %c15_i32 : i32 to vector<16x128xi32>
    %30 = arith.shrui %28, %29 : vector<16x128xi32>
    %31 = arith.xori %28, %30 : vector<16x128xi32>
    %c-2073254261_i32 = arith.constant -2073254261 : i32
    %32 = vector.broadcast %c-2073254261_i32 : i32 to vector<16x128xi32>
    %33 = arith.muli %31, %32 : vector<16x128xi32>
    %c16_i32_8 = arith.constant 16 : i32
    %34 = vector.broadcast %c16_i32_8 : i32 to vector<16x128xi32>
    %35 = arith.shrui %33, %34 : vector<16x128xi32>
    %36 = arith.xori %33, %35 : vector<16x128xi32>
    %c-2147483648_i32 = arith.constant -2147483648 : i32
    %37 = vector.broadcast %c-2147483648_i32 : i32 to vector<16x128xi32>
    %38 = arith.cmpi ult, %36, %37 : vector<16x128xi32>
    %cst_9 = arith.constant 2.000000e+00 : f32
    %39 = vector.broadcast %cst_9 : f32 to vector<16x128xf32>
    %40 = arith.mulf %14, %39 : vector<16x128xf32>
    %cst_10 = arith.constant 0.000000e+00 : f32
    %41 = vector.broadcast %cst_10 : f32 to vector<16x128xf32>
    %42 = arith.select %38, %40, %41 : vector<16x128xi1>, vector<16x128xf32>
    %43 = arith.truncf %42 : vector<16x128xf32> to vector<16x128xbf16>
    %c0_11 = arith.constant 0 : index
    %c0_12 = arith.constant 0 : index
    %44 = vector.load %arg5[%c0_11, %c0_12] : memref<128x128xbf16, #tpu.memory_space<vmem>>, vector<128x128xbf16>
    %cst_13 = arith.constant dense<0.000000e+00> : vector<16x128xf32>
    %45 = tpu.matmul %43, %44, %cst_13 {dimension_numbers = #tpu.dot_dimension_numbers<[1], [0], [0], [1], [0, 0, 1, 1], [], []>} : vector<16x128xbf16>, vector<128x128xbf16>, vector<16x128xf32> -> vector<16x128xf32>
    %c0_14 = arith.constant 0 : index
    %c0_15 = arith.constant 0 : index
    %46 = vector.load %arg6[%c0_14, %c0_15] : memref<1x128xf32, #tpu.memory_space<vmem>>, vector<1x128xf32>
    %47 = vector.broadcast %46 : vector<1x128xf32> to vector<16x128xf32>
    %48 = arith.addf %45, %47 : vector<16x128xf32>
    %cst_16 = arith.constant 0.000000e+00 : f32
    %49 = vector.broadcast %cst_16 : f32 to vector<16x128xf32>
    %50 = arith.maximumf %48, %49 : vector<16x128xf32>
    %c-1640531535_i32_17 = arith.constant -1640531535 : i32
    %51 = vector.broadcast %c-1640531535_i32_17 : i32 to vector<16x128xi32>
    %52 = arith.muli %4, %51 : vector<16x128xi32>
    %c-2048144777_i32_18 = arith.constant -2048144777 : i32
    %53 = vector.broadcast %c-2048144777_i32_18 : i32 to vector<16x128xi32>
    %54 = arith.muli %5, %53 : vector<16x128xi32>
    %55 = arith.xori %52, %54 : vector<16x128xi32>
    %c2_i32 = arith.constant 2 : i32
    %c-1028477379_i32_19 = arith.constant -1028477379 : i32
    %56 = arith.muli %c2_i32, %c-1028477379_i32_19 : i32
    %57 = arith.addi %0, %56 : i32
    %58 = vector.broadcast %57 : i32 to vector<16x128xi32>
    %59 = arith.xori %55, %58 : vector<16x128xi32>
    %c16_i32_20 = arith.constant 16 : i32
    %60 = vector.broadcast %c16_i32_20 : i32 to vector<16x128xi32>
    %61 = arith.shrui %59, %60 : vector<16x128xi32>
    %62 = arith.xori %59, %61 : vector<16x128xi32>
    %c2146121005_i32_21 = arith.constant 2146121005 : i32
    %63 = vector.broadcast %c2146121005_i32_21 : i32 to vector<16x128xi32>
    %64 = arith.muli %62, %63 : vector<16x128xi32>
    %c15_i32_22 = arith.constant 15 : i32
    %65 = vector.broadcast %c15_i32_22 : i32 to vector<16x128xi32>
    %66 = arith.shrui %64, %65 : vector<16x128xi32>
    %67 = arith.xori %64, %66 : vector<16x128xi32>
    %c-2073254261_i32_23 = arith.constant -2073254261 : i32
    %68 = vector.broadcast %c-2073254261_i32_23 : i32 to vector<16x128xi32>
    %69 = arith.muli %67, %68 : vector<16x128xi32>
    %c16_i32_24 = arith.constant 16 : i32
    %70 = vector.broadcast %c16_i32_24 : i32 to vector<16x128xi32>
    %71 = arith.shrui %69, %70 : vector<16x128xi32>
    %72 = arith.xori %69, %71 : vector<16x128xi32>
    %c-2147483648_i32_25 = arith.constant -2147483648 : i32
    %73 = vector.broadcast %c-2147483648_i32_25 : i32 to vector<16x128xi32>
    %74 = arith.cmpi ult, %72, %73 : vector<16x128xi32>
    %cst_26 = arith.constant 2.000000e+00 : f32
    %75 = vector.broadcast %cst_26 : f32 to vector<16x128xf32>
    %76 = arith.mulf %50, %75 : vector<16x128xf32>
    %cst_27 = arith.constant 0.000000e+00 : f32
    %77 = vector.broadcast %cst_27 : f32 to vector<16x128xf32>
    %78 = arith.select %74, %76, %77 : vector<16x128xi1>, vector<16x128xf32>
    %c0_28 = arith.constant 0 : index
    %c0_29 = arith.constant 0 : index
    %79 = vector.load %arg7[%c0_28, %c0_29] : memref<16x128xf32, #tpu.memory_space<vmem>>, vector<16x128xf32>
    tpu.vector_store %arg7[%c0_28, %c0_29], %78 {strides = array<i32>} : memref<16x128xf32, #tpu.memory_space<vmem>>, vector<16x128xf32>,
    return
  }
  func.func @transform_0(%arg0: i32, %arg1: memref<1xi32, #tpu.memory_space<smem>>) -> (i32, i32) {
    %c0_i32 = arith.constant 0 : i32
    %c0_i32_0 = arith.constant 0 : i32
    return %arg0, %c0_i32 : i32, i32
  }
  func.func @transform_1(%arg0: i32, %arg1: memref<1xi32, #tpu.memory_space<smem>>) -> (i32, i32) {
    %c0_i32 = arith.constant 0 : i32
    %c0_i32_0 = arith.constant 0 : i32
    %c0_i32_1 = arith.constant 0 : i32
    return %c0_i32, %c0_i32_0 : i32, i32
  }
  func.func @transform_2(%arg0: i32, %arg1: memref<1xi32, #tpu.memory_space<smem>>) -> (i32, i32) {
    %c0_i32 = arith.constant 0 : i32
    %c0_i32_0 = arith.constant 0 : i32
    %c0_i32_1 = arith.constant 0 : i32
    return %c0_i32, %c0_i32_0 : i32, i32
  }
  func.func @transform_3(%arg0: i32, %arg1: memref<1xi32, #tpu.memory_space<smem>>) -> (i32, i32) {
    %c0_i32 = arith.constant 0 : i32
    %c0_i32_0 = arith.constant 0 : i32
    %c0_i32_1 = arith.constant 0 : i32
    return %c0_i32, %c0_i32_0 : i32, i32
  }
  func.func @transform_4(%arg0: i32, %arg1: memref<1xi32, #tpu.memory_space<smem>>) -> (i32, i32) {
    %c0_i32 = arith.constant 0 : i32
    %c0_i32_0 = arith.constant 0 : i32
    %c0_i32_1 = arith.constant 0 : i32
    return %c0_i32, %c0_i32_0 : i32, i32
  }
  func.func @transform_5(%arg0: i32, %arg1: memref<1xi32, #tpu.memory_space<smem>>) -> (i32, i32) {
    %c0_i32 = arith.constant 0 : i32
    %c0_i32_0 = arith.constant 0 : i32
    return %arg0, %c0_i32 : i32, i32
  }
}

</mosaic_0001>

<llo_original>
// kernel: tpu_custom_call.1
$region0: #{tpu_custom_call.1}
  #allocation0 [shape = 'u32[]', space=smem, size = 0x4, offset = 0x4, fixed_abs, tag = 'smem constant byte address 0x4 - core index']
  #allocation1 [shape = 'u32[144,128]{1,0:T(1,128)}', space=vmem, size = 0x12000, scoped, tag = 'internal scratch']
  #allocation2 [shape = 's32[1]{0}', space=sflag, size = 0x4, scoped, tag = 'scoped memory for tpu_custom_call.1']
  #allocation3 [shape = 's32[1]{0:T(128)S(6)}', space=smem, size = 0x200, scoped, tag = 'prefetched SMEM operand 0']
  %s0 = inlined_call_operand.<no memory space> [shape: s32[1], index: 0, kind: input, shape index: {}]
  %s1 = inlined_call_operand.hbm [shape: f32[16,128], index: 1, kind: input, shape index: {}]
  %s2 = inlined_call_operand.hbm [shape: bf16[128,128], index: 2, kind: input, shape index: {}]
  %s3 = inlined_call_operand.vmem [shape: f32[1,128], index: 3, kind: input, shape index: {}]
  %s4 = inlined_call_operand.hbm [shape: bf16[128,128], index: 4, kind: input, shape index: {}]
  %s5 = inlined_call_operand.vmem [shape: f32[1,128], index: 5, kind: input, shape index: {}]
  %s6 = inlined_call_operand.hbm [shape: f32[16,128], index: 6, kind: output, shape index: {}]
  %s7 = sld [smem:[#allocation0]]
  $region42: #{tpu_custom_call.1} parent=0
    _
  %s9 = ssub.s32 1, %s7
  %s10 = scalar_select 0, %s9, %s7
  %11 = sst [smem:[#allocation3]] %s0
  $region1: #{tpu_custom_call.1} parent=0
    #allocation4 [shape = 'u8[8192]{0}', space=vmem, size = 0x2000, scoped, tag = 'input window, operand 1, single buffered']
    #allocation5 [shape = 's32[1]{0}', space=sflag, size = 0x4, scoped, tag = 'scoped memory for tpu_custom_call.1']
    #allocation6 [shape = 's32[1]{0}', space=sflag, size = 0x4, scoped, tag = 'scoped memory for tpu_custom_call.1']
    #allocation7 [shape = 'u8[32768]{0}', space=vmem, size = 0x8000, scoped, tag = 'input window, operand 2, single buffered']
    #allocation8 [shape = 's32[1]{0}', space=sflag, size = 0x4, scoped, tag = 'scoped memory for tpu_custom_call.1']
    #allocation9 [shape = 'u8[32768]{0}', space=vmem, size = 0x8000, scoped, tag = 'input window, operand 4, single buffered']
    #allocation10 [shape = 'u8[8192]{0}', space=vmem, size = 0x2000, scoped, tag = 'output window, operand 0, single buffered']
    %12 = vsyncpa [#allocation5], 0
    %13 = vsyncpa [#allocation8], 0
    %14 = vsyncpa [#allocation6], 0
    // Predicated region
    $region2: #{tpu_custom_call.1} parent=1 // pred_check
      _
    $region3: #{tpu_custom_call.1} parent=1 // pred_check_branch
      %16 = sbr.rel (0) target = $region5
    $region4: #{tpu_custom_call.1} parent=1 // pred_region
      %s18 = ssub.s32 256, 256
      %19 = vsyncadd [#allocation5], %s18
      %s20 = sshll.u32 [#allocation4], 4
      %s21 = int_to_ptr.vmem [resolvable:$true] %s20
      %26 = dma.hbm_to_vmem [thread:$0]  %s1, 256, %s21, [#allocation5], 128, 128, 8
    $region5: #{tpu_custom_call.1} parent=1 // pred_fallthru
      _
    // Predicated region
    $region6: #{tpu_custom_call.1} parent=1 // pred_check
      _
    $region7: #{tpu_custom_call.1} parent=1 // pred_check_branch
      %28 = sbr.rel (0) target = $region9
    $region8: #{tpu_custom_call.1} parent=1 // pred_region
      %s30 = ssub.s32 1024, 1024
      %31 = vsyncadd [#allocation8], %s30
      %s32 = sshll.u32 [#allocation7], 4
      %s33 = int_to_ptr.vmem [resolvable:$true] %s32
      %38 = dma.hbm_to_vmem [thread:$0]  %s2, 1024, %s33, [#allocation8], 64, 64, 4
    $region9: #{tpu_custom_call.1} parent=1 // pred_fallthru
      _
    // Predicated region
    $region10: #{tpu_custom_call.1} parent=1 // pred_check
      _
    $region11: #{tpu_custom_call.1} parent=1 // pred_check_branch
      %40 = sbr.rel (0) target = $region13
    $region12: #{tpu_custom_call.1} parent=1 // pred_region
      _
    $region13: #{tpu_custom_call.1} parent=1 // pred_fallthru
      _
    // Predicated region
    $region14: #{tpu_custom_call.1} parent=1 // pred_check
      _
    $region15: #{tpu_custom_call.1} parent=1 // pred_check_branch
      %42 = sbr.rel (0) target = $region17
    $region16: #{tpu_custom_call.1} parent=1 // pred_region
      %s44 = ssub.s32 1024, 1024
      %45 = vsyncadd [#allocation8], %s44
      %s46 = sshll.u32 [#allocation9], 4
      %s47 = int_to_ptr.vmem [resolvable:$true] %s46
      %52 = dma.hbm_to_vmem [thread:$0]  %s4, 1024, %s47, [#allocation8], 64, 64, 4
    $region17: #{tpu_custom_call.1} parent=1 // pred_fallthru
      _
    // Predicated region
    $region18: #{tpu_custom_call.1} parent=1 // pred_check
      _
    $region19: #{tpu_custom_call.1} parent=1 // pred_check_branch
      %54 = sbr.rel (0) target = $region21
    $region20: #{tpu_custom_call.1} parent=1 // pred_region
      _
    $region21: #{tpu_custom_call.1} parent=1 // pred_fallthru
      _
    // Predicated region
    $region22: #{tpu_custom_call.1} parent=1 // pred_check
      _
    $region23: #{tpu_custom_call.1} parent=1 // pred_check_branch
      %56 = sbr.rel (0) target = $region25
    $region24: #{tpu_custom_call.1} parent=1 // pred_region
      %57 = dma.done [#allocation5], 256
    $region25: #{tpu_custom_call.1} parent=1 // pred_fallthru
      _
    // Predicated region
    $region26: #{tpu_custom_call.1} parent=1 // pred_check
      _
    $region27: #{tpu_custom_call.1} parent=1 // pred_check_branch
      %59 = sbr.rel (0) target = $region29
    $region28: #{tpu_custom_call.1} parent=1 // pred_region
      %60 = dma.done [#allocation8], 1024
    $region29: #{tpu_custom_call.1} parent=1 // pred_fallthru
      _
    // Predicated region
    $region30: #{tpu_custom_call.1} parent=1 // pred_check
      _
    $region31: #{tpu_custom_call.1} parent=1 // pred_check_branch
      %62 = sbr.rel (0) target = $region33
    $region32: #{tpu_custom_call.1} parent=1 // pred_region
      %63 = dma.done [#allocation8], 1024
    $region33: #{tpu_custom_call.1} parent=1 // pred_fallthru
      _
    %s65 = sld [smem:[#allocation3]]
    %v66 = vlaneseq
    %v67 = vshrl.u32 %v66, 7
    %v68 = vadd.s32 %v67, 8
    %s69 = smul.u32 0, 16
    %v70 = vstv %s69
    %v71 = vadd.s32 %v67, %v70
    %v72 = vadd.s32 %v68, %v70
    %v73 = vlaneseq
    %v74 = vand.u32 %v73, 127
    %v75 = vld [vmem:[#allocation4] sm:$0xff]
    %v76 = vld [vmem:[#allocation4 + $0x8] sm:$0xff]
    %v77 = vpack.c.bf16 %v76, %v75
    %v78 = vld [vmem:[#allocation7] sm:$0xf]
    %v79 = vld [vmem:[#allocation7 + $0x4] sm:$0xf]
    %v80 = vld [vmem:[#allocation7 + $0x8] sm:$0xf]
    %v81 = vld [vmem:[#allocation7 + $0xc] sm:$0xf]
    %v82 = vld [vmem:[#allocation7 + $0x10] sm:$0xf]
    %v83 = vld [vmem:[#allocation7 + $0x14] sm:$0xf]
    %v84 = vld [vmem:[#allocation7 + $0x18] sm:$0xf]
    %v85 = vld [vmem:[#allocation7 + $0x1c] sm:$0xf]
    %v86 = vld [vmem:[#allocation7 + $0x20] sm:$0xf]
    %v87 = vld [vmem:[#allocation7 + $0x24] sm:$0xf]
    %v88 = vld [vmem:[#allocation7 + $0x28] sm:$0xf]
    %v89 = vld [vmem:[#allocation7 + $0x2c] sm:$0xf]
    %v90 = vld [vmem:[#allocation7 + $0x30] sm:$0xf]
    %v91 = vld [vmem:[#allocation7 + $0x34] sm:$0xf]
    %v92 = vld [vmem:[#allocation7 + $0x38] sm:$0xf]
    %v93 = vld [vmem:[#allocation7 + $0x3c] sm:$0xf]
    %v94 = vld [vmem:[%s3] sm:$0x1]
    %v96 = vlaneseq
    %v97 = vshrl.u32 %v96, 7
    %v98 = vsub.s32 0, %v97
    %v99 = vrot.slane %v94, %v98
    %v117 = vunpack.c.l.b16 %v78
    %v118 = vunpack.c.l.b16 %v79
    %v119 = vunpack.c.l.b16 %v80
    %v120 = vunpack.c.l.b16 %v81
    %v121 = vunpack.c.l.b16 %v82
    %v122 = vunpack.c.l.b16 %v83
    %v123 = vunpack.c.l.b16 %v84
    %v124 = vunpack.c.l.b16 %v85
    %v125 = vunpack.c.l.b16 %v86
    %v126 = vunpack.c.l.b16 %v87
    %v127 = vunpack.c.l.b16 %v88
    %v128 = vunpack.c.l.b16 %v89
    %v129 = vunpack.c.l.b16 %v90
    %v130 = vunpack.c.l.b16 %v91
    %v131 = vunpack.c.l.b16 %v92
    %v132 = vunpack.c.l.b16 %v93
    %v133 = vpack.c.b16 %v118, %v117
    %v134 = vpack.c.b16 %v120, %v119
    %v135 = vpack.c.b16 %v122, %v121
    %v136 = vpack.c.b16 %v124, %v123
    %v137 = vpack.c.b16 %v126, %v125
    %v138 = vpack.c.b16 %v128, %v127
    %v139 = vpack.c.b16 %v130, %v129
    %v140 = vpack.c.b16 %v132, %v131
    %149 = vmatprep.subr.bf16.mxu0 0
    %150 = vmatpush1.bf16.msra.mxu0 %v133
    %151 = vmatprep.subr.bf16.mxu0 0
    %152 = vmatpush1.bf16.msra.mxu0 %v134
    %153 = vmatprep.subr.bf16.mxu0 0
    %154 = vmatpush1.bf16.msra.mxu0 %v135
    %155 = vmatprep.subr.bf16.mxu0 0
    %156 = vmatpush1.bf16.msra.mxu0 %v136
    %157 = vmatprep.subr.bf16.mxu0 0
    %158 = vmatpush1.bf16.msra.mxu0 %v137
    %159 = vmatprep.subr.bf16.mxu0 0
    %160 = vmatpush1.bf16.msra.mxu0 %v138
    %161 = vmatprep.subr.bf16.mxu0 0
    %162 = vmatpush1.bf16.msra.mxu0 %v139
    %163 = vmatprep.subr.bf16.mxu0 0
    %164 = vmatpush1.bf16.msra.mxu0 %v140
    %165 = vmatprep.subr.bf16.mxu0 0
    %166 = vmatpush1.bf16.msra.mxu0 0
    %167 = vmatprep.subr.bf16.mxu0 0
    %168 = vmatpush1.bf16.msra.mxu0 0
    %169 = vmatprep.subr.bf16.mxu0 0
    %170 = vmatpush1.bf16.msra.mxu0 0
    %171 = vmatprep.subr.bf16.mxu0 0
    %172 = vmatpush1.bf16.msra.mxu0 0
    %173 = vmatprep.subr.bf16.mxu0 0
    %174 = vmatpush1.bf16.msra.mxu0 0
    %175 = vmatprep.subr.bf16.mxu0 0
    %176 = vmatpush1.bf16.msra.mxu0 0
    %177 = vmatprep.subr.bf16.mxu0 0
    %178 = vmatpush1.bf16.msra.mxu0 0
    %179 = vmatprep.subr.bf16.mxu0 0
    %180 = vmatpush1.bf16.msra.mxu0 0
    %181 = vmatprep.mubr.bf16.mxu0 0
    %182 = vmatmul.mubr.bf16.gmra.mrb[0].mxu0 %v77
    %v183 = vpop.f32.mrb[0].mxu0
    %v184 = vadd.f32 %v99, %v183
    %v185 = vpop.f32.mrb[0].mxu0
    %v186 = vpop.f32.mrb[0].mxu0
    %v187 = vadd.f32 %v99, %v186
    %v188 = vpop.f32.mrb[0].mxu0
    %189 = vdwg.mxu0
    %v190 = vmax.f32 %v184, 0.0
    %v191 = vmax.f32 %v187, 0.0
    %v192 = vmul.u32 %v71, 2654435761
    %v193 = vmul.u32 %v72, 2654435761
    %v194 = vmul.u32 %v74, 2246822519
    %v195 = vxor.u32 %v192, %v194
    %v196 = vxor.u32 %v193, %v194
    %s197 = sadd.s32 %s65, 3266489917
    %v198 = vstv %s197
    %v199 = vxor.u32 %v195, %v198
    %v200 = vxor.u32 %v196, %v198
    %v201 = vshrl.u32 %v199, 16
    %v202 = vshrl.u32 %v200, 16
    %v203 = vxor.u32 %v199, %v201
    %v204 = vxor.u32 %v200, %v202
    %v205 = vmul.u32 %v203, 2146121005
    %v206 = vmul.u32 %v204, 2146121005
    %v207 = vshrl.u32 %v205, 15
    %v208 = vshrl.u32 %v206, 15
    %v209 = vxor.u32 %v205, %v207
    %v210 = vxor.u32 %v206, %v208
    %v211 = vmul.u32 %v209, 2221713035
    %v212 = vmul.u32 %v210, 2221713035
    %v213 = vshrl.u32 %v211, 16
    %v214 = vshrl.u32 %v212, 16
    %v215 = vxor.u32 %v211, %v213
    %v216 = vxor.u32 %v212, %v214
    %vm217 = vcmp.lt.u32.totalorder %v215, 2147483648
    %vm218 = vcmp.lt.u32.totalorder %v216, 2147483648
    %v219 = vmul.f32 %v190, 2.0
    %v220 = vmul.f32 %v191, 2.0
    %v221 = vsel %vm217, %v219, 0.0
    %v222 = vsel %vm218, %v220, 0.0
    %v223 = vpack.c.bf16 %v222, %v221
    %v224 = vld [vmem:[#allocation9] sm:$0xf]
    %v225 = vld [vmem:[#allocation9 + $0x4] sm:$0xf]
    %v226 = vld [vmem:[#allocation9 + $0x8] sm:$0xf]
    %v227 = vld [vmem:[#allocation9 + $0xc] sm:$0xf]
    %v228 = vld [vmem:[#allocation9 + $0x10] sm:$0xf]
    %v229 = vld [vmem:[#allocation9 + $0x14] sm:$0xf]
    %v230 = vld [vmem:[#allocation9 + $0x18] sm:$0xf]
    %v231 = vld [vmem:[#allocation9 + $0x1c] sm:$0xf]
    %v232 = vld [vmem:[#allocation9 + $0x20] sm:$0xf]
    %v233 = vld [vmem:[#allocation9 + $0x24] sm:$0xf]
    %v234 = vld [vmem:[#allocation9 + $0x28] sm:$0xf]
    %v235 = vld [vmem:[#allocation9 + $0x2c] sm:$0xf]
    %v236 = vld [vmem:[#allocation9 + $0x30] sm:$0xf]
    %v237 = vld [vmem:[#allocation9 + $0x34] sm:$0xf]
    %v238 = vld [vmem:[#allocation9 + $0x38] sm:$0xf]
    %v239 = vld [vmem:[#allocation9 + $0x3c] sm:$0xf]
    %v240 = vld [vmem:[%s5] sm:$0x1]
    %v242 = vlaneseq
    %v243 = vshrl.u32 %v242, 7
    %v244 = vsub.s32 0, %v243
    %v245 = vrot.slane %v240, %v244
    %v263 = vunpack.c.l.b16 %v224
    %v264 = vunpack.c.l.b16 %v225
    %v265 = vunpack.c.l.b16 %v226
    %v266 = vunpack.c.l.b16 %v227
    %v267 = vunpack.c.l.b16 %v228
    %v268 = vunpack.c.l.b16 %v229
    %v269 = vunpack.c.l.b16 %v230
    %v270 = vunpack.c.l.b16 %v231
    %v271 = vunpack.c.l.b16 %v232
    %v272 = vunpack.c.l.b16 %v233
    %v273 = vunpack.c.l.b16 %v234
    %v274 = vunpack.c.l.b16 %v235
    %v275 = vunpack.c.l.b16 %v236
    %v276 = vunpack.c.l.b16 %v237
    %v277 = vunpack.c.l.b16 %v238
    %v278 = vunpack.c.l.b16 %v239
    %v279 = vpack.c.b16 %v264, %v263
    %v280 = vpack.c.b16 %v266, %v265
    %v281 = vpack.c.b16 %v268, %v267
    %v282 = vpack.c.b16 %v270, %v269
    %v283 = vpack.c.b16 %v272, %v271
    %v284 = vpack.c.b16 %v274, %v273
    %v285 = vpack.c.b16 %v276, %v275
    %v286 = vpack.c.b16 %v278, %v277
    %295 = vmatprep.subr.bf16.mxu0 0
    %296 = vmatpush1.bf16.msra.mxu0 %v279
    %297 = vmatprep.subr.bf16.mxu0 0
    %298 = vmatpush1.bf16.msra.mxu0 %v280
    %299 = vmatprep.subr.bf16.mxu0 0
    %300 = vmatpush1.bf16.msra.mxu0 %v281
    %301 = vmatprep.subr.bf16.mxu0 0
    %302 = vmatpush1.bf16.msra.mxu0 %v282
    %303 = vmatprep.subr.bf16.mxu0 0
    %304 = vmatpush1.bf16.msra.mxu0 %v283
    %305 = vmatprep.subr.bf16.mxu0 0
    %306 = vmatpush1.bf16.msra.mxu0 %v284
    %307 = vmatprep.subr.bf16.mxu0 0
    %308 = vmatpush1.bf16.msra.mxu0 %v285
    %309 = vmatprep.subr.bf16.mxu0 0
    %310 = vmatpush1.bf16.msra.mxu0 %v286
    %311 = vmatprep.subr.bf16.mxu0 0
    %312 = vmatpush1.bf16.msra.mxu0 0
    %313 = vmatprep.subr.bf16.mxu0 0
    %314 = vmatpush1.bf16.msra.mxu0 0
    %315 = vmatprep.subr.bf16.mxu0 0
    %316 = vmatpush1.bf16.msra.mxu0 0
    %317 = vmatprep.subr.bf16.mxu0 0
    %318 = vmatpush1.bf16.msra.mxu0 0
    %319 = vmatprep.subr.bf16.mxu0 0
    %320 = vmatpush1.bf16.msra.mxu0 0
    %321 = vmatprep.subr.bf16.mxu0 0
    %322 = vmatpush1.bf16.msra.mxu0 0
    %323 = vmatprep.subr.bf16.mxu0 0
    %324 = vmatpush1.bf16.msra.mxu0 0
    %325 = vmatprep.subr.bf16.mxu0 0
    %326 = vmatpush1.bf16.msra.mxu0 0
    %327 = vmatprep.mubr.bf16.mxu0 0
    %328 = vmatmul.mubr.bf16.gmra.mrb[0].mxu0 %v223
    %v329 = vpop.f32.mrb[0].mxu0
    %v330 = vadd.f32 %v245, %v329
    %v331 = vpop.f32.mrb[0].mxu0
    %v332 = vpop.f32.mrb[0].mxu0
    %v333 = vadd.f32 %v245, %v332
    %v334 = vpop.f32.mrb[0].mxu0
    %335 = vdwg.mxu0
    %v336 = vmax.f32 %v330, 0.0
    %v337 = vmax.f32 %v333, 0.0
    %s338 = sadd.s32 %s65, 2238012538
    %v339 = vstv %s338
    %v340 = vxor.u32 %v195, %v339
    %v341 = vxor.u32 %v196, %v339
    %v342 = vshrl.u32 %v340, 16
    %v343 = vshrl.u32 %v341, 16
    %v344 = vxor.u32 %v340, %v342
    %v345 = vxor.u32 %v341, %v343
    %v346 = vmul.u32 %v344, 2146121005
    %v347 = vmul.u32 %v345, 2146121005
    %v348 = vshrl.u32 %v346, 15
    %v349 = vshrl.u32 %v347, 15
    %v350 = vxor.u32 %v346, %v348
    %v351 = vxor.u32 %v347, %v349
    %v352 = vmul.u32 %v350, 2221713035
    %v353 = vmul.u32 %v351, 2221713035
    %v354 = vshrl.u32 %v352, 16
    %v355 = vshrl.u32 %v353, 16
    %v356 = vxor.u32 %v352, %v354
    %v357 = vxor.u32 %v353, %v355
    %vm358 = vcmp.lt.u32.totalorder %v356, 2147483648
    %vm359 = vcmp.lt.u32.totalorder %v357, 2147483648
    %v360 = vmul.f32 %v336, 2.0
    %v361 = vmul.f32 %v337, 2.0
    %v362 = vsel %vm358, %v360, 0.0
    %v363 = vsel %vm359, %v361, 0.0
    %364 = vst [vmem:[#allocation10] sm:$0xff] %v362
    %365 = vst [vmem:[#allocation10 + $0x8] sm:$0xff] %v363
    // Predicated region
    $region34: #{tpu_custom_call.1} parent=1 // pred_check
      _
    $region35: #{tpu_custom_call.1} parent=1 // pred_check_branch
      %367 = sbr.rel (0) target = $region37
    $region36: #{tpu_custom_call.1} parent=1 // pred_region
      %s369 = ssub.s32 256, 256
      %370 = vsyncadd [#allocation6], %s369
      %s371 = sshll.u32 [#allocation10], 4
      %s372 = int_to_ptr.vmem [resolvable:$true] %s371
      %377 = dma.vmem_to_hbm [thread:$0]  %s372, 256, %s6, [#allocation6], 128, 128, 8
    $region37: #{tpu_custom_call.1} parent=1 // pred_fallthru
      _
    // Predicated region
    $region38: #{tpu_custom_call.1} parent=1 // pred_check
      _
    $region39: #{tpu_custom_call.1} parent=1 // pred_check_branch
      %379 = sbr.rel (0) target = $region41
    $region40: #{tpu_custom_call.1} parent=1 // pred_region
      %380 = dma.done [#allocation6], 256
    $region41: #{tpu_custom_call.1} parent=1 // pred_fallthru
      _
    %381 = vsyncpa [#allocation5], 1
    %382 = vsyncpa [#allocation8], 1
    %383 = vsyncpa [#allocation6], 1

</llo_original>
